<compile_context>
chip_gen: v5e
topology: v5e:2x2
jax: 0.10.0
libtpu: 0.0.40
codegen_flags: <defaults>
</compile_context>

<pallas_src>
import functools

import jax
import jax.numpy as jnp
import numpy as np
from jax.experimental import pallas as pl
from jax.experimental.pallas import tpu as pltpu


def _lstm_chunk_kernel(lens_ref, x_ref, wih_ref, whh_ref, b_ref, out_ref,
                       pre_ref, h_ref, c_ref,
                       *, B, H, Tc, G, mm_dtype):
    """One time-chunk of the LSTM recurrence.

    lens_ref: (B, 1)   int32   sequence lengths (tiny, constant across chunks)
    x_ref:    (Tc*B, D)        time-major input rows for this chunk
    wih_ref:  (D, 4H)          W_ih^T, i/f/o columns pre-scaled by 0.5 (tanh-only gates)
    whh_ref:  (H, 4H)          W_hh^T, same pre-scaling
    b_ref:    (1, 4H)          b_ih + b_hh, same pre-scaling
    out_ref:  (Tc/G, B, G*H)   G timesteps packed along lanes -> lane-dense stores
    pre_ref:  (Tc*B, 4H) f32   scratch: per-chunk input projection (+ bias)
    h_ref, c_ref: (B, H) f32   scratch: recurrent state, persists across grid steps
    """
    c_idx = pl.program_id(0)

    @pl.when(c_idx == 0)
    def _init():
        h_ref[...] = jnp.zeros_like(h_ref)
        c_ref[...] = jnp.zeros_like(c_ref)

    # Non-recurrent projection for the whole chunk: one batched MXU pass, bias folded in.
    pre_ref[...] = (
        jnp.dot(x_ref[...].astype(mm_dtype), wih_ref[...].astype(mm_dtype),
                preferred_element_type=jnp.float32)
        + b_ref[...].astype(jnp.float32)
    )

    # ---- Hoisted loop invariants -------------------------------------------------------
    whh = whh_ref[...].astype(mm_dtype)                 # recurrent weights stay resident
    lens = lens_ref[...]                                # (B, 1) int32
    lane = jax.lax.broadcasted_iota(jnp.int32, (B, 4 * H), 1)
    is_g = jnp.logical_and(lane >= 2 * H, lane < 3 * H)  # PyTorch gate order i, f, g, o
    # Gate columns were pre-scaled so sigmoid(x) == 0.5*tanh(x/2) + 0.5 and tanh(x) stays
    # tanh(x): a single EUP tanh pass + a per-lane FMA reconstructs all four activations.
    act_a = jnp.where(is_g, 1.0, 0.5).astype(jnp.float32)   # (B, 4H), hoisted (no per-iter
    act_b = jnp.where(is_g, 0.0, 0.5).astype(jnp.float32)   #  broadcast re-materialization)
    t0 = c_idx * Tc

    # ---- Serial recurrence: groups of G steps -> one 128-lane-wide output store ---------
    def group(g, carry):
        h, c = carry
        packed = []
        for j in range(G):                               # static unroll inside a group
            t_loc = g * G + j
            row = pl.multiple_of(t_loc * B, B)           # sublane-aligned slice of pre_ref
            gates = pre_ref[pl.ds(row, B), :] + jnp.dot(
                h.astype(mm_dtype), whh, preferred_element_type=jnp.float32)
            act = jnp.tanh(gates) * act_a + act_b        # single transcendental pass
            i_g = act[:, 0 * H:1 * H]
            f_g = act[:, 1 * H:2 * H]
            g_g = act[:, 2 * H:3 * H]
            o_g = act[:, 3 * H:4 * H]
            c = f_g * c + i_g * g_g
            h = o_g * jnp.tanh(c)
            # pad_packed_sequence zero-fill; jnp.where (not *0) so inf/NaN cannot leak.
            valid = (t0 + t_loc) < lens                  # (B, 1) bool
            packed.append(jnp.where(valid, h, 0.0))
        out_ref[g] = jnp.concatenate(packed, axis=-1).astype(out_ref.dtype)
        return h, c

    n_groups = Tc // G
    h_fin, c_fin = jax.lax.fori_loop(
        0, n_groups, group, (h_ref[...], c_ref[...]),
        unroll=max(1, min(4, n_groups)))                 # bounded unroll -> bounded vregs
    h_ref[...] = h_fin                                   # carry (h, c) to the next chunk
    c_ref[...] = c_fin


def lstm_encoder_pallas(x_btd, lengths, w_ih, w_hh, b_ih, b_hh, *,
                        time_chunk=64, matmul_dtype=jnp.float32,
                        vmem_limit_bytes=32 * 1024 * 1024):
    """Pallas forward of Seq2SeqEncoder(nn.LSTM, num_layers=1, bidirectional=False).

    x_btd: (B, T, D) float32 batch-first padded input; lengths: (B,) int.
    Returns the full padded (B, T, H); slice to max(lengths) outside (mirrors
    pad_packed_sequence truncation without introducing dynamic shapes here).
    """
    B, T, D = x_btd.shape
    H = w_ih.shape[0] // 4

    # Lane-dense output packing: pack G timesteps into one 128-lane row while H < 128.
    G = (128 // H) if (H < 128 and 128 % H == 0) else 1

    # Time chunking (grid axis): Tc a multiple of G, T padded up to a multiple of Tc.
    Tc = max(G, min(int(time_chunk), T))
    Tc = G * (-(-Tc // G))
    num_chunks = pl.cdiv(T, Tc)
    Tp = num_chunks * Tc
    if Tp != T:
        x_btd = jnp.pad(x_btd, ((0, 0), (0, Tp - T), (0, 0)))  # mask zeroes padded steps

    # Fold sigmoid(x)=0.5*tanh(x/2)+0.5 into the (tiny) weights/bias once, outside the
    # kernel: i/f/o gate columns * 0.5, g (cell candidate) columns * 1.0.
    gate_scale = jnp.concatenate([
        jnp.full((2 * H,), 0.5, jnp.float32),       # i, f
        jnp.full((H,), 1.0, jnp.float32),           # g
        jnp.full((H,), 0.5, jnp.float32),           # o
    ])
    wih_t = (jnp.transpose(w_ih, (1, 0)) * gate_scale[None, :]).astype(matmul_dtype)
    whh_t = (jnp.transpose(w_hh, (1, 0)) * gate_scale[None, :]).astype(matmul_dtype)
    bias = ((b_ih + b_hh) * gate_scale).reshape(1, 4 * H).astype(jnp.float32)

    # TODO(synk): the time-major transpose of x and the back-transpose of the output are
    #             extra HBM passes; keep time-major I/O end-to-end if downstream allows.
    x_flat = jnp.transpose(x_btd, (1, 0, 2)).reshape(Tp * B, D).astype(matmul_dtype)
    lens_col = lengths.astype(jnp.int32).reshape(B, 1)          # tiny (B, 1) VMEM input

    kernel = functools.partial(_lstm_chunk_kernel, B=B, H=H, Tc=Tc, G=G,
                               mm_dtype=matmul_dtype)

    grid_spec = pltpu.PrefetchScalarGridSpec(
        num_scalar_prefetch=0,
        grid=(num_chunks,),              # serial time chunks; (h, c) carried in scratch
        in_specs=[
            # TODO(synk): invariant operands could use pipeline_mode=pl.Buffered(1) to drop
            #             the second pipeline buffer; constant index_maps already avoid
            #             re-DMA across chunks.
            pl.BlockSpec((B, 1), lambda c: (0, 0)),             # lengths
            pl.BlockSpec((Tc * B, D), lambda c: (c, 0)),        # x chunk (pipelined)
            pl.BlockSpec((D, 4 * H), lambda c: (0, 0)),         # W_ih^T (pre-scaled)
            pl.BlockSpec((H, 4 * H), lambda c: (0, 0)),         # W_hh^T (pre-scaled)
            pl.BlockSpec((1, 4 * H), lambda c: (0, 0)),         # bias   (pre-scaled)
        ],
        out_specs=pl.BlockSpec((Tc // G, B, G * H), lambda c: (c, 0, 0)),
        scratch_shapes=[
            pltpu.VMEM((Tc * B, 4 * H), jnp.float32),           # per-chunk input projection
            pltpu.VMEM((B, H), jnp.float32),                    # h carry (persists)
            pltpu.VMEM((B, H), jnp.float32),                    # c carry (persists)
        ],
    )

    out_packed = pl.pallas_call(
        kernel,
        out_shape=jax.ShapeDtypeStruct((Tp // G, B, G * H), jnp.float32),
        grid_spec=grid_spec,
        compiler_params=pltpu.CompilerParams(
            dimension_semantics=("arbitrary",),   # serial carry -> must not megacore-shard
            vmem_limit_bytes=vmem_limit_bytes,
        ),
    )(lens_col, x_flat, wih_t, whh_t, bias)

    # Un-pack lanes: (Tp/G, B, G*H) -> (B, Tp, H), then drop time padding.
    out_bth = (out_packed.reshape(Tp // G, B, G, H)
               .transpose(1, 0, 2, 3)
               .reshape(B, Tp, H))
    return out_bth[:, :T, :]


def lstm_encoder_ref(x_btd, lengths, w_ih, w_hh, b_ih, b_hh):
    """Pure-JAX reference (mirrors PyTorch packed-LSTM output semantics)."""
    B, T, D = x_btd.shape
    H = w_ih.shape[0] // 4
    bias = b_ih + b_hh

    def step(carry, x_t):
        h, c = carry
        gates = x_t @ w_ih.T + h @ w_hh.T + bias
        i = jax.nn.sigmoid(gates[:, 0 * H:1 * H])
        f = jax.nn.sigmoid(gates[:, 1 * H:2 * H])
        g = jnp.tanh(gates[:, 2 * H:3 * H])
        o = jax.nn.sigmoid(gates[:, 3 * H:4 * H])
        c = f * c + i * g
        h = o * jnp.tanh(c)
        return (h, c), h

    h0 = jnp.zeros((B, H), jnp.float32)
    c0 = jnp.zeros((B, H), jnp.float32)
    _, hs = jax.lax.scan(step, (h0, c0), jnp.transpose(x_btd, (1, 0, 2)))
    hs = jnp.transpose(hs, (1, 0, 2))                      # (B, T, H)
    mask = (jnp.arange(T)[None, :] < lengths[:, None])[:, :, None]
    return jnp.where(mask, hs, 0.0)


if __name__ == "__main__":
    # Small shapes consistent with the module: batch=8, seq=8, input_size=16, hidden_size=32.
    B, T, D, H = 8, 8, 16, 32

    key = jax.random.PRNGKey(0)
    k_x, k1, k2, k3, k4 = jax.random.split(key, 5)

    x = jax.random.normal(k_x, (B, T, D), jnp.float32)
    lengths = jnp.array([8, 5, 3, 8, 1, 7, 4, 6], dtype=jnp.int32)

    # PyTorch-style init: U(-1/sqrt(H), 1/sqrt(H)).
    bound = 1.0 / np.sqrt(H)
    w_ih = jax.random.uniform(k1, (4 * H, D), jnp.float32, -bound, bound)
    w_hh = jax.random.uniform(k2, (4 * H, H), jnp.float32, -bound, bound)
    b_ih = jax.random.uniform(k3, (4 * H,), jnp.float32, -bound, bound)
    b_hh = jax.random.uniform(k4, (4 * H,), jnp.float32, -bound, bound)

    out_full = jax.block_until_ready(
        lstm_encoder_pallas(x, lengths, w_ih, w_hh, b_ih, b_hh))

    # pad_packed_sequence pads only up to max(lengths).
    max_len = int(np.max(np.asarray(lengths)))
    out = np.asarray(out_full)[:, :max_len, :]

    ref = np.asarray(lstm_encoder_ref(x, lengths, w_ih, w_hh, b_ih, b_hh))[:, :max_len, :]
    np.testing.assert_allclose(out, ref, rtol=1e-4, atol=1e-5)

    # Production-style bf16 matmul-operand path (f32 state/activations): looser check.
    out_bf16 = jax.block_until_ready(
        lstm_encoder_pallas(x, lengths, w_ih, w_hh, b_ih, b_hh,
                            matmul_dtype=jnp.bfloat16))
    np.testing.assert_allclose(np.asarray(out_bf16)[:, :max_len, :], ref,
                               rtol=0, atol=5e-2)

    print("KERNEL_OK")
</pallas_src>

<mosaic_0001>
module attributes {stable_mosaic.version = 11 : i64} {
  func.func @_lstm_chunk_kernel(%arg0: i32, %arg1: memref<8x1xi32, #tpu.memory_space<vmem>>, %arg2: memref<64x16xf32, #tpu.memory_space<vmem>>, %arg3: memref<16x128xf32, #tpu.memory_space<vmem>>, %arg4: memref<32x128xf32, #tpu.memory_space<vmem>>, %arg5: memref<1x128xf32, #tpu.memory_space<vmem>>, %arg6: memref<2x8x128xf32, #tpu.memory_space<vmem>>, %arg7: memref<64x128xf32, #tpu.memory_space<vmem>>, %arg8: memref<8x32xf32, #tpu.memory_space<vmem>>, %arg9: memref<8x32xf32, #tpu.memory_space<vmem>>) attributes {dimension_semantics = [#tpu.dimension_semantics<arbitrary>], iteration_bounds = array<i64: 1>, scalar_prefetch = 0 : i64, scratch_operands = 3 : i64, tpu.core_type = #tpu.core_type<tc>, window_params = [{pipeline_mode = #tpu.pipeline_mode<synchronous>, transform_indices = @transform_0, window_bounds = array<i64: 8, 1>}, {transform_indices = @transform_1, window_bounds = array<i64: 64, 16>}, {pipeline_mode = #tpu.pipeline_mode<synchronous>, transform_indices = @transform_2, window_bounds = array<i64: 16, 128>}, {pipeline_mode = #tpu.pipeline_mode<synchronous>, transform_indices = @transform_3, window_bounds = array<i64: 32, 128>}, {pipeline_mode = #tpu.pipeline_mode<synchronous>, transform_indices = @transform_4, window_bounds = array<i64: 1, 128>}, {transform_indices = @transform_5, window_bounds = array<i64: 2, 8, 128>}]} {
    %c0_i32 = arith.constant 0 : i32
    %0 = arith.cmpi eq, %arg0, %c0_i32 : i32
    %1 = arith.extui %0 : i1 to i32
    %c0_i32_0 = arith.constant 0 : i32
    %2 = arith.cmpi ne, %1, %c0_i32_0 : i32
    scf.if %2 {
      %cst_75 = arith.constant 0.000000e+00 : f32
      %255 = vector.broadcast %cst_75 : f32 to vector<8x32xf32>
      %c0_76 = arith.constant 0 : index
      %c0_77 = arith.constant 0 : index
      %256 = vector.load %arg8[%c0_76, %c0_77] : memref<8x32xf32, #tpu.memory_space<vmem>>, vector<8x32xf32>
      tpu.vector_store %arg8[%c0_76, %c0_77], %255 {strides = array<i32>} : memref<8x32xf32, #tpu.memory_space<vmem>>, vector<8x32xf32>,
      %cst_78 = arith.constant 0.000000e+00 : f32
      %257 = vector.broadcast %cst_78 : f32 to vector<8x32xf32>
      %c0_79 = arith.constant 0 : index
      %c0_80 = arith.constant 0 : index
      %258 = vector.load %arg9[%c0_79, %c0_80] : memref<8x32xf32, #tpu.memory_space<vmem>>, vector<8x32xf32>
      tpu.vector_store %arg9[%c0_79, %c0_80], %257 {strides = array<i32>} : memref<8x32xf32, #tpu.memory_space<vmem>>, vector<8x32xf32>,
    } else {
    }
    %c0 = arith.constant 0 : index
    %c0_1 = arith.constant 0 : index
    %3 = vector.load %arg2[%c0, %c0_1] : memref<64x16xf32, #tpu.memory_space<vmem>>, vector<64x16xf32>
    %c0_2 = arith.constant 0 : index
    %c0_3 = arith.constant 0 : index
    %4 = vector.load %arg3[%c0_2, %c0_3] : memref<16x128xf32, #tpu.memory_space<vmem>>, vector<16x128xf32>
    %cst = arith.constant dense<0.000000e+00> : vector<64x128xf32>
    %5 = tpu.matmul %3, %4, %cst {dimension_numbers = #tpu.dot_dimension_numbers<[1], [0], [0], [1], [0, 0, 1, 1], [], []>} : vector<64x16xf32>, vector<16x128xf32>, vector<64x128xf32> -> vector<64x128xf32>
    %c0_4 = arith.constant 0 : index
    %c0_5 = arith.constant 0 : index
    %6 = vector.load %arg5[%c0_4, %c0_5] : memref<1x128xf32, #tpu.memory_space<vmem>>, vector<1x128xf32>
    %7 = vector.broadcast %6 : vector<1x128xf32> to vector<64x128xf32>
    %8 = arith.addf %5, %7 : vector<64x128xf32>
    %c0_6 = arith.constant 0 : index
    %c0_7 = arith.constant 0 : index
    %9 = vector.load %arg7[%c0_6, %c0_7] : memref<64x128xf32, #tpu.memory_space<vmem>>, vector<64x128xf32>
    tpu.vector_store %arg7[%c0_6, %c0_7], %8 {strides = array<i32>} : memref<64x128xf32, #tpu.memory_space<vmem>>, vector<64x128xf32>,
    %c0_8 = arith.constant 0 : index
    %c0_9 = arith.constant 0 : index
    %10 = vector.load %arg4[%c0_8, %c0_9] : memref<32x128xf32, #tpu.memory_space<vmem>>, vector<32x128xf32>
    %c0_10 = arith.constant 0 : index
    %c0_11 = arith.constant 0 : index
    %11 = vector.load %arg1[%c0_10, %c0_11] : memref<8x1xi32, #tpu.memory_space<vmem>>, vector<8x1xi32>
    %12 = tpu.iota {dimensions = array<i32: 1>} : vector<8x128xi32>
    %c64_i32 = arith.constant 64 : i32
    %13 = vector.broadcast %c64_i32 : i32 to vector<8x128xi32>
    %14 = arith.cmpi sge, %12, %13 : vector<8x128xi32>
    %c96_i32 = arith.constant 96 : i32
    %15 = vector.broadcast %c96_i32 : i32 to vector<8x128xi32>
    %16 = arith.cmpi slt, %12, %15 : vector<8x128xi32>
    %17 = arith.andi %14, %16 : vector<8x128xi1>
    %cst_12 = arith.constant 1.000000e+00 : f32
    %cst_13 = arith.constant 5.000000e-01 : f32
    %18 = vector.broadcast %cst_12 : f32 to vector<8x128xf32>
    %19 = vector.broadcast %cst_13 : f32 to vector<8x128xf32>
    %20 = arith.select %17, %18, %19 : vector<8x128xi1>, vector<8x128xf32>
    %cst_14 = arith.constant 0.000000e+00 : f32
    %cst_15 = arith.constant 5.000000e-01 : f32
    %21 = vector.broadcast %cst_14 : f32 to vector<8x128xf32>
    %22 = vector.broadcast %cst_15 : f32 to vector<8x128xf32>
    %23 = arith.select %17, %21, %22 : vector<8x128xi1>, vector<8x128xf32>
    %c8_i32 = arith.constant 8 : i32
    %24 = arith.muli %arg0, %c8_i32 : i32
    %c0_16 = arith.constant 0 : index
    %c0_17 = arith.constant 0 : index
    %25 = vector.load %arg8[%c0_16, %c0_17] : memref<8x32xf32, #tpu.memory_space<vmem>>, vector<8x32xf32>
    %c0_18 = arith.constant 0 : index
    %c0_19 = arith.constant 0 : index
    %26 = vector.load %arg9[%c0_18, %c0_19] : memref<8x32xf32, #tpu.memory_space<vmem>>, vector<8x32xf32>
    %c0_i32_20 = arith.constant 0 : i32
    %c4_i32 = arith.constant 4 : i32
    %27 = arith.muli %c0_i32_20, %c4_i32 : i32
    %c0_i32_21 = arith.constant 0 : i32
    %28 = arith.addi %27, %c0_i32_21 : i32
    %c8_i32_22 = arith.constant 8 : i32
    %29 = arith.muli %28, %c8_i32_22 : i32
    %30 = tpu.assume_multiple %29, 8 : i32
    %31 = arith.index_cast %30 : i32 to index
    %c0_23 = arith.constant 0 : index
    %32 = vector.load %arg7[%31, %c0_23] : memref<64x128xf32, #tpu.memory_space<vmem>>, vector<8x128xf32>
    %cst_24 = arith.constant dense<0.000000e+00> : vector<8x128xf32>
    %33 = tpu.matmul %25, %10, %cst_24 {dimension_numbers = #tpu.dot_dimension_numbers<[1], [0], [0], [1], [0, 0, 1, 1], [], []>} : vector<8x32xf32>, vector<32x128xf32>, vector<8x128xf32> -> vector<8x128xf32>
    %34 = arith.addf %32, %33 : vector<8x128xf32>
    %35 = math.tanh %34 : vector<8x128xf32>
    %36 = arith.mulf %35, %20 : vector<8x128xf32>
    %37 = arith.addf %36, %23 : vector<8x128xf32>
    %38 = vector.extract_strided_slice %37 {offsets = [0, 0], sizes = [8, 32], strides = [1, 1]} : vector<8x128xf32> to vector<8x32xf32>
    %39 = vector.extract_strided_slice %37 {offsets = [0, 32], sizes = [8, 32], strides = [1, 1]} : vector<8x128xf32> to vector<8x32xf32>
    %40 = vector.extract_strided_slice %37 {offsets = [0, 64], sizes = [8, 32], strides = [1, 1]} : vector<8x128xf32> to vector<8x32xf32>
    %41 = vector.extract_strided_slice %37 {offsets = [0, 96], sizes = [8, 32], strides = [1, 1]} : vector<8x128xf32> to vector<8x32xf32>
    %42 = arith.mulf %39, %26 : vector<8x32xf32>
    %43 = arith.mulf %38, %40 : vector<8x32xf32>
    %44 = arith.addf %42, %43 : vector<8x32xf32>
    %45 = math.tanh %44 : vector<8x32xf32>
    %46 = arith.mulf %41, %45 : vector<8x32xf32>
    %47 = arith.addi %24, %28 : i32
    %48 = vector.broadcast %47 : i32 to vector<8x1xi32>
    %49 = arith.cmpi slt, %48, %11 : vector<8x1xi32>
    %cst_25 = arith.constant 0.000000e+00 : f32
    %50 = vector.shape_cast %49 : vector<8x1xi1> to vector<8x1xi1>
    %51 = vector.broadcast %50 : vector<8x1xi1> to vector<8x32xi1>
    %52 = vector.broadcast %cst_25 : f32 to vector<8x32xf32>
    %53 = arith.select %51, %46, %52 : vector<8x32xi1>, vector<8x32xf32>
    %c4_i32_26 = arith.constant 4 : i32
    %54 = arith.muli %c0_i32_20, %c4_i32_26 : i32
    %c1_i32 = arith.constant 1 : i32
    %55 = arith.addi %54, %c1_i32 : i32
    %c8_i32_27 = arith.constant 8 : i32
    %56 = arith.muli %55, %c8_i32_27 : i32
    %57 = tpu.assume_multiple %56, 8 : i32
    %58 = arith.index_cast %57 : i32 to index
    %c0_28 = arith.constant 0 : index
    %59 = vector.load %arg7[%58, %c0_28] : memref<64x128xf32, #tpu.memory_space<vmem>>, vector<8x128xf32>
    %cst_29 = arith.constant dense<0.000000e+00> : vector<8x128xf32>
    %60 = tpu.matmul %46, %10, %cst_29 {dimension_numbers = #tpu.dot_dimension_numbers<[1], [0], [0], [1], [0, 0, 1, 1], [], []>} : vector<8x32xf32>, vector<32x128xf32>, vector<8x128xf32> -> vector<8x128xf32>
    %61 = arith.addf %59, %60 : vector<8x128xf32>
    %62 = math.tanh %61 : vector<8x128xf32>
    %63 = arith.mulf %62, %20 : vector<8x128xf32>
    %64 = arith.addf %63, %23 : vector<8x128xf32>
    %65 = vector.extract_strided_slice %64 {offsets = [0, 0], sizes = [8, 32], strides = [1, 1]} : vector<8x128xf32> to vector<8x32xf32>
    %66 = vector.extract_strided_slice %64 {offsets = [0, 32], sizes = [8, 32], strides = [1, 1]} : vector<8x128xf32> to vector<8x32xf32>
    %67 = vector.extract_strided_slice %64 {offsets = [0, 64], sizes = [8, 32], strides = [1, 1]} : vector<8x128xf32> to vector<8x32xf32>
    %68 = vector.extract_strided_slice %64 {offsets = [0, 96], sizes = [8, 32], strides = [1, 1]} : vector<8x128xf32> to vector<8x32xf32>
    %69 = arith.mulf %66, %44 : vector<8x32xf32>
    %70 = arith.mulf %65, %67 : vector<8x32xf32>
    %71 = arith.addf %69, %70 : vector<8x32xf32>
    %72 = math.tanh %71 : vector<8x32xf32>
    %73 = arith.mulf %68, %72 : vector<8x32xf32>
    %74 = arith.addi %24, %55 : i32
    %75 = vector.broadcast %74 : i32 to vector<8x1xi32>
    %76 = arith.cmpi slt, %75, %11 : vector<8x1xi32>
    %cst_30 = arith.constant 0.000000e+00 : f32
    %77 = vector.shape_cast %76 : vector<8x1xi1> to vector<8x1xi1>
    %78 = vector.broadcast %77 : vector<8x1xi1> to vector<8x32xi1>
    %79 = vector.broadcast %cst_30 : f32 to vector<8x32xf32>
    %80 = arith.select %78, %73, %79 : vector<8x32xi1>, vector<8x32xf32>
    %c4_i32_31 = arith.constant 4 : i32
    %81 = arith.muli %c0_i32_20, %c4_i32_31 : i32
    %c2_i32 = arith.constant 2 : i32
    %82 = arith.addi %81, %c2_i32 : i32
    %c8_i32_32 = arith.constant 8 : i32
    %83 = arith.muli %82, %c8_i32_32 : i32
    %84 = tpu.assume_multiple %83, 8 : i32
    %85 = arith.index_cast %84 : i32 to index
    %c0_33 = arith.constant 0 : index
    %86 = vector.load %arg7[%85, %c0_33] : memref<64x128xf32, #tpu.memory_space<vmem>>, vector<8x128xf32>
    %cst_34 = arith.constant dense<0.000000e+00> : vector<8x128xf32>
    %87 = tpu.matmul %73, %10, %cst_34 {dimension_numbers = #tpu.dot_dimension_numbers<[1], [0], [0], [1], [0, 0, 1, 1], [], []>} : vector<8x32xf32>, vector<32x128xf32>, vector<8x128xf32> -> vector<8x128xf32>
    %88 = arith.addf %86, %87 : vector<8x128xf32>
    %89 = math.tanh %88 : vector<8x128xf32>
    %90 = arith.mulf %89, %20 : vector<8x128xf32>
    %91 = arith.addf %90, %23 : vector<8x128xf32>
    %92 = vector.extract_strided_slice %91 {offsets = [0, 0], sizes = [8, 32], strides = [1, 1]} : vector<8x128xf32> to vector<8x32xf32>
    %93 = vector.extract_strided_slice %91 {offsets = [0, 32], sizes = [8, 32], strides = [1, 1]} : vector<8x128xf32> to vector<8x32xf32>
    %94 = vector.extract_strided_slice %91 {offsets = [0, 64], sizes = [8, 32], strides = [1, 1]} : vector<8x128xf32> to vector<8x32xf32>
    %95 = vector.extract_strided_slice %91 {offsets = [0, 96], sizes = [8, 32], strides = [1, 1]} : vector<8x128xf32> to vector<8x32xf32>
    %96 = arith.mulf %93, %71 : vector<8x32xf32>
    %97 = arith.mulf %92, %94 : vector<8x32xf32>
    %98 = arith.addf %96, %97 : vector<8x32xf32>
    %99 = math.tanh %98 : vector<8x32xf32>
    %100 = arith.mulf %95, %99 : vector<8x32xf32>
    %101 = arith.addi %24, %82 : i32
    %102 = vector.broadcast %101 : i32 to vector<8x1xi32>
    %103 = arith.cmpi slt, %102, %11 : vector<8x1xi32>
    %cst_35 = arith.constant 0.000000e+00 : f32
    %104 = vector.shape_cast %103 : vector<8x1xi1> to vector<8x1xi1>
    %105 = vector.broadcast %104 : vector<8x1xi1> to vector<8x32xi1>
    %106 = vector.broadcast %cst_35 : f32 to vector<8x32xf32>
    %107 = arith.select %105, %100, %106 : vector<8x32xi1>, vector<8x32xf32>
    %c4_i32_36 = arith.constant 4 : i32
    %108 = arith.muli %c0_i32_20, %c4_i32_36 : i32
    %c3_i32 = arith.constant 3 : i32
    %109 = arith.addi %108, %c3_i32 : i32
    %c8_i32_37 = arith.constant 8 : i32
    %110 = arith.muli %109, %c8_i32_37 : i32
    %111 = tpu.assume_multiple %110, 8 : i32
    %112 = arith.index_cast %111 : i32 to index
    %c0_38 = arith.constant 0 : index
    %113 = vector.load %arg7[%112, %c0_38] : memref<64x128xf32, #tpu.memory_space<vmem>>, vector<8x128xf32>
    %cst_39 = arith.constant dense<0.000000e+00> : vector<8x128xf32>
    %114 = tpu.matmul %100, %10, %cst_39 {dimension_numbers = #tpu.dot_dimension_numbers<[1], [0], [0], [1], [0, 0, 1, 1], [], []>} : vector<8x32xf32>, vector<32x128xf32>, vector<8x128xf32> -> vector<8x128xf32>
    %115 = arith.addf %113, %114 : vector<8x128xf32>
    %116 = math.tanh %115 : vector<8x128xf32>
    %117 = arith.mulf %116, %20 : vector<8x128xf32>
    %118 = arith.addf %117, %23 : vector<8x128xf32>
    %119 = vector.extract_strided_slice %118 {offsets = [0, 0], sizes = [8, 32], strides = [1, 1]} : vector<8x128xf32> to vector<8x32xf32>
    %120 = vector.extract_strided_slice %118 {offsets = [0, 32], sizes = [8, 32], strides = [1, 1]} : vector<8x128xf32> to vector<8x32xf32>
    %121 = vector.extract_strided_slice %118 {offsets = [0, 64], sizes = [8, 32], strides = [1, 1]} : vector<8x128xf32> to vector<8x32xf32>
    %122 = vector.extract_strided_slice %118 {offsets = [0, 96], sizes = [8, 32], strides = [1, 1]} : vector<8x128xf32> to vector<8x32xf32>
    %123 = arith.mulf %120, %98 : vector<8x32xf32>
    %124 = arith.mulf %119, %121 : vector<8x32xf32>
    %125 = arith.addf %123, %124 : vector<8x32xf32>
    %126 = math.tanh %125 : vector<8x32xf32>
    %127 = arith.mulf %122, %126 : vector<8x32xf32>
    %128 = arith.addi %24, %109 : i32
    %129 = vector.broadcast %128 : i32 to vector<8x1xi32>
    %130 = arith.cmpi slt, %129, %11 : vector<8x1xi32>
    %cst_40 = arith.constant 0.000000e+00 : f32
    %131 = vector.shape_cast %130 : vector<8x1xi1> to vector<8x1xi1>
    %132 = vector.broadcast %131 : vector<8x1xi1> to vector<8x32xi1>
    %133 = vector.broadcast %cst_40 : f32 to vector<8x32xf32>
    %134 = arith.select %132, %127, %133 : vector<8x32xi1>, vector<8x32xf32>
    %135 = tpu.concatenate %53, %80, %107, %134 in 1 : vector<8x32xf32>, vector<8x32xf32>, vector<8x32xf32>, vector<8x32xf32> -> vector<8x128xf32>
    %136 = arith.index_cast %c0_i32_20 : i32 to index
    %c0_41 = arith.constant 0 : index
    %c0_42 = arith.constant 0 : index
    %137 = vector.load %arg6[%136, %c0_41, %c0_42] : memref<2x8x128xf32, #tpu.memory_space<vmem>>, vector<1x8x128xf32>
    %138 = vector.shape_cast %137 : vector<1x8x128xf32> to vector<8x128xf32>
    %139 = vector.shape_cast %135 : vector<8x128xf32> to vector<1x8x128xf32>
    tpu.vector_store %arg6[%136, %c0_41, %c0_42], %139 {strides = array<i32>} : memref<2x8x128xf32, #tpu.memory_space<vmem>>, vector<1x8x128xf32>,
    %c1_i32_43 = arith.constant 1 : i32
    %c4_i32_44 = arith.constant 4 : i32
    %140 = arith.muli %c1_i32_43, %c4_i32_44 : i32
    %c0_i32_45 = arith.constant 0 : i32
    %141 = arith.addi %140, %c0_i32_45 : i32
    %c8_i32_46 = arith.constant 8 : i32
    %142 = arith.muli %141, %c8_i32_46 : i32
    %143 = tpu.assume_multiple %142, 8 : i32
    %144 = arith.index_cast %143 : i32 to index
    %c0_47 = arith.constant 0 : index
    %145 = vector.load %arg7[%144, %c0_47] : memref<64x128xf32, #tpu.memory_space<vmem>>, vector<8x128xf32>
    %cst_48 = arith.constant dense<0.000000e+00> : vector<8x128xf32>
    %146 = tpu.matmul %127, %10, %cst_48 {dimension_numbers = #tpu.dot_dimension_numbers<[1], [0], [0], [1], [0, 0, 1, 1], [], []>} : vector<8x32xf32>, vector<32x128xf32>, vector<8x128xf32> -> vector<8x128xf32>
    %147 = arith.addf %145, %146 : vector<8x128xf32>
    %148 = math.tanh %147 : vector<8x128xf32>
    %149 = arith.mulf %148, %20 : vector<8x128xf32>
    %150 = arith.addf %149, %23 : vector<8x128xf32>
    %151 = vector.extract_strided_slice %150 {offsets = [0, 0], sizes = [8, 32], strides = [1, 1]} : vector<8x128xf32> to vector<8x32xf32>
    %152 = vector.extract_strided_slice %150 {offsets = [0, 32], sizes = [8, 32], strides = [1, 1]} : vector<8x128xf32> to vector<8x32xf32>
    %153 = vector.extract_strided_slice %150 {offsets = [0, 64], sizes = [8, 32], strides = [1, 1]} : vector<8x128xf32> to vector<8x32xf32>
    %154 = vector.extract_strided_slice %150 {offsets = [0, 96], sizes = [8, 32], strides = [1, 1]} : vector<8x128xf32> to vector<8x32xf32>
    %155 = arith.mulf %152, %125 : vector<8x32xf32>
    %156 = arith.mulf %151, %153 : vector<8x32xf32>
    %157 = arith.addf %155, %156 : vector<8x32xf32>
    %158 = math.tanh %157 : vector<8x32xf32>
    %159 = arith.mulf %154, %158 : vector<8x32xf32>
    %160 = arith.addi %24, %141 : i32
    %161 = vector.broadcast %160 : i32 to vector<8x1xi32>
    %162 = arith.cmpi slt, %161, %11 : vector<8x1xi32>
    %cst_49 = arith.constant 0.000000e+00 : f32
    %163 = vector.shape_cast %162 : vector<8x1xi1> to vector<8x1xi1>
    %164 = vector.broadcast %163 : vector<8x1xi1> to vector<8x32xi1>
    %165 = vector.broadcast %cst_49 : f32 to vector<8x32xf32>
    %166 = arith.select %164, %159, %165 : vector<8x32xi1>, vector<8x32xf32>
    %c4_i32_50 = arith.constant 4 : i32
    %167 = arith.muli %c1_i32_43, %c4_i32_50 : i32
    %c1_i32_51 = arith.constant 1 : i32
    %168 = arith.addi %167, %c1_i32_51 : i32
    %c8_i32_52 = arith.constant 8 : i32
    %169 = arith.muli %168, %c8_i32_52 : i32
    %170 = tpu.assume_multiple %169, 8 : i32
    %171 = arith.index_cast %170 : i32 to index
    %c0_53 = arith.constant 0 : index
    %172 = vector.load %arg7[%171, %c0_53] : memref<64x128xf32, #tpu.memory_space<vmem>>, vector<8x128xf32>
    %cst_54 = arith.constant dense<0.000000e+00> : vector<8x128xf32>
    %173 = tpu.matmul %159, %10, %cst_54 {dimension_numbers = #tpu.dot_dimension_numbers<[1], [0], [0], [1], [0, 0, 1, 1], [], []>} : vector<8x32xf32>, vector<32x128xf32>, vector<8x128xf32> -> vector<8x128xf32>
    %174 = arith.addf %172, %173 : vector<8x128xf32>
    %175 = math.tanh %174 : vector<8x128xf32>
    %176 = arith.mulf %175, %20 : vector<8x128xf32>
    %177 = arith.addf %176, %23 : vector<8x128xf32>
    %178 = vector.extract_strided_slice %177 {offsets = [0, 0], sizes = [8, 32], strides = [1, 1]} : vector<8x128xf32> to vector<8x32xf32>
    %179 = vector.extract_strided_slice %177 {offsets = [0, 32], sizes = [8, 32], strides = [1, 1]} : vector<8x128xf32> to vector<8x32xf32>
    %180 = vector.extract_strided_slice %177 {offsets = [0, 64], sizes = [8, 32], strides = [1, 1]} : vector<8x128xf32> to vector<8x32xf32>
    %181 = vector.extract_strided_slice %177 {offsets = [0, 96], sizes = [8, 32], strides = [1, 1]} : vector<8x128xf32> to vector<8x32xf32>
    %182 = arith.mulf %179, %157 : vector<8x32xf32>
    %183 = arith.mulf %178, %180 : vector<8x32xf32>
    %184 = arith.addf %182, %183 : vector<8x32xf32>
    %185 = math.tanh %184 : vector<8x32xf32>
    %186 = arith.mulf %181, %185 : vector<8x32xf32>
    %187 = arith.addi %24, %168 : i32
    %188 = vector.broadcast %187 : i32 to vector<8x1xi32>
    %189 = arith.cmpi slt, %188, %11 : vector<8x1xi32>
    %cst_55 = arith.constant 0.000000e+00 : f32
    %190 = vector.shape_cast %189 : vector<8x1xi1> to vector<8x1xi1>
    %191 = vector.broadcast %190 : vector<8x1xi1> to vector<8x32xi1>
    %192 = vector.broadcast %cst_55 : f32 to vector<8x32xf32>
    %193 = arith.select %191, %186, %192 : vector<8x32xi1>, vector<8x32xf32>
    %c4_i32_56 = arith.constant 4 : i32
    %194 = arith.muli %c1_i32_43, %c4_i32_56 : i32
    %c2_i32_57 = arith.constant 2 : i32
    %195 = arith.addi %194, %c2_i32_57 : i32
    %c8_i32_58 = arith.constant 8 : i32
    %196 = arith.muli %195, %c8_i32_58 : i32
    %197 = tpu.assume_multiple %196, 8 : i32
    %198 = arith.index_cast %197 : i32 to index
    %c0_59 = arith.constant 0 : index
    %199 = vector.load %arg7[%198, %c0_59] : memref<64x128xf32, #tpu.memory_space<vmem>>, vector<8x128xf32>
    %cst_60 = arith.constant dense<0.000000e+00> : vector<8x128xf32>
    %200 = tpu.matmul %186, %10, %cst_60 {dimension_numbers = #tpu.dot_dimension_numbers<[1], [0], [0], [1], [0, 0, 1, 1], [], []>} : vector<8x32xf32>, vector<32x128xf32>, vector<8x128xf32> -> vector<8x128xf32>
    %201 = arith.addf %199, %200 : vector<8x128xf32>
    %202 = math.tanh %201 : vector<8x128xf32>
    %203 = arith.mulf %202, %20 : vector<8x128xf32>
    %204 = arith.addf %203, %23 : vector<8x128xf32>
    %205 = vector.extract_strided_slice %204 {offsets = [0, 0], sizes = [8, 32], strides = [1, 1]} : vector<8x128xf32> to vector<8x32xf32>
    %206 = vector.extract_strided_slice %204 {offsets = [0, 32], sizes = [8, 32], strides = [1, 1]} : vector<8x128xf32> to vector<8x32xf32>
    %207 = vector.extract_strided_slice %204 {offsets = [0, 64], sizes = [8, 32], strides = [1, 1]} : vector<8x128xf32> to vector<8x32xf32>
    %208 = vector.extract_strided_slice %204 {offsets = [0, 96], sizes = [8, 32], strides = [1, 1]} : vector<8x128xf32> to vector<8x32xf32>
    %209 = arith.mulf %206, %184 : vector<8x32xf32>
    %210 = arith.mulf %205, %207 : vector<8x32xf32>
    %211 = arith.addf %209, %210 : vector<8x32xf32>
    %212 = math.tanh %211 : vector<8x32xf32>
    %213 = arith.mulf %208, %212 : vector<8x32xf32>
    %214 = arith.addi %24, %195 : i32
    %215 = vector.broadcast %214 : i32 to vector<8x1xi32>
    %216 = arith.cmpi slt, %215, %11 : vector<8x1xi32>
    %cst_61 = arith.constant 0.000000e+00 : f32
    %217 = vector.shape_cast %216 : vector<8x1xi1> to vector<8x1xi1>
    %218 = vector.broadcast %217 : vector<8x1xi1> to vector<8x32xi1>
    %219 = vector.broadcast %cst_61 : f32 to vector<8x32xf32>
    %220 = arith.select %218, %213, %219 : vector<8x32xi1>, vector<8x32xf32>
    %c4_i32_62 = arith.constant 4 : i32
    %221 = arith.muli %c1_i32_43, %c4_i32_62 : i32
    %c3_i32_63 = arith.constant 3 : i32
    %222 = arith.addi %221, %c3_i32_63 : i32
    %c8_i32_64 = arith.constant 8 : i32
    %223 = arith.muli %222, %c8_i32_64 : i32
    %224 = tpu.assume_multiple %223, 8 : i32
    %225 = arith.index_cast %224 : i32 to index
    %c0_65 = arith.constant 0 : index
    %226 = vector.load %arg7[%225, %c0_65] : memref<64x128xf32, #tpu.memory_space<vmem>>, vector<8x128xf32>
    %cst_66 = arith.constant dense<0.000000e+00> : vector<8x128xf32>
    %227 = tpu.matmul %213, %10, %cst_66 {dimension_numbers = #tpu.dot_dimension_numbers<[1], [0], [0], [1], [0, 0, 1, 1], [], []>} : vector<8x32xf32>, vector<32x128xf32>, vector<8x128xf32> -> vector<8x128xf32>
    %228 = arith.addf %226, %227 : vector<8x128xf32>
    %229 = math.tanh %228 : vector<8x128xf32>
    %230 = arith.mulf %229, %20 : vector<8x128xf32>
    %231 = arith.addf %230, %23 : vector<8x128xf32>
    %232 = vector.extract_strided_slice %231 {offsets = [0, 0], sizes = [8, 32], strides = [1, 1]} : vector<8x128xf32> to vector<8x32xf32>
    %233 = vector.extract_strided_slice %231 {offsets = [0, 32], sizes = [8, 32], strides = [1, 1]} : vector<8x128xf32> to vector<8x32xf32>
    %234 = vector.extract_strided_slice %231 {offsets = [0, 64], sizes = [8, 32], strides = [1, 1]} : vector<8x128xf32> to vector<8x32xf32>
    %235 = vector.extract_strided_slice %231 {offsets = [0, 96], sizes = [8, 32], strides = [1, 1]} : vector<8x128xf32> to vector<8x32xf32>
    %236 = arith.mulf %233, %211 : vector<8x32xf32>
    %237 = arith.mulf %232, %234 : vector<8x32xf32>
    %238 = arith.addf %236, %237 : vector<8x32xf32>
    %239 = math.tanh %238 : vector<8x32xf32>
    %240 = arith.mulf %235, %239 : vector<8x32xf32>
    %241 = arith.addi %24, %222 : i32
    %242 = vector.broadcast %241 : i32 to vector<8x1xi32>
    %243 = arith.cmpi slt, %242, %11 : vector<8x1xi32>
    %cst_67 = arith.constant 0.000000e+00 : f32
    %244 = vector.shape_cast %243 : vector<8x1xi1> to vector<8x1xi1>
    %245 = vector.broadcast %244 : vector<8x1xi1> to vector<8x32xi1>
    %246 = vector.broadcast %cst_67 : f32 to vector<8x32xf32>
    %247 = arith.select %245, %240, %246 : vector<8x32xi1>, vector<8x32xf32>
    %248 = tpu.concatenate %166, %193, %220, %247 in 1 : vector<8x32xf32>, vector<8x32xf32>, vector<8x32xf32>, vector<8x32xf32> -> vector<8x128xf32>
    %249 = arith.index_cast %c1_i32_43 : i32 to index
    %c0_68 = arith.constant 0 : index
    %c0_69 = arith.constant 0 : index
    %250 = vector.load %arg6[%249, %c0_68, %c0_69] : memref<2x8x128xf32, #tpu.memory_space<vmem>>, vector<1x8x128xf32>
    %251 = vector.shape_cast %250 : vector<1x8x128xf32> to vector<8x128xf32>
    %252 = vector.shape_cast %248 : vector<8x128xf32> to vector<1x8x128xf32>
    tpu.vector_store %arg6[%249, %c0_68, %c0_69], %252 {strides = array<i32>} : memref<2x8x128xf32, #tpu.memory_space<vmem>>, vector<1x8x128xf32>,
    %c2_i32_70 = arith.constant 2 : i32
    %c0_71 = arith.constant 0 : index
    %c0_72 = arith.constant 0 : index
    %253 = vector.load %arg8[%c0_71, %c0_72] : memref<8x32xf32, #tpu.memory_space<vmem>>, vector<8x32xf32>
    tpu.vector_store %arg8[%c0_71, %c0_72], %240 {strides = array<i32>} : memref<8x32xf32, #tpu.memory_space<vmem>>, vector<8x32xf32>,
    %c0_73 = arith.constant 0 : index
    %c0_74 = arith.constant 0 : index
    %254 = vector.load %arg9[%c0_73, %c0_74] : memref<8x32xf32, #tpu.memory_space<vmem>>, vector<8x32xf32>
    tpu.vector_store %arg9[%c0_73, %c0_74], %238 {strides = array<i32>} : memref<8x32xf32, #tpu.memory_space<vmem>>, vector<8x32xf32>,
    return
  }
  func.func @transform_0(%arg0: i32) -> (i32, i32) {
    %c0_i32 = arith.constant 0 : i32
    %c0_i32_0 = arith.constant 0 : i32
    %c0_i32_1 = arith.constant 0 : i32
    return %c0_i32, %c0_i32_0 : i32, i32
  }
  func.func @transform_1(%arg0: i32) -> (i32, i32) {
    %c0_i32 = arith.constant 0 : i32
    %c0_i32_0 = arith.constant 0 : i32
    return %arg0, %c0_i32 : i32, i32
  }
  func.func @transform_2(%arg0: i32) -> (i32, i32) {
    %c0_i32 = arith.constant 0 : i32
    %c0_i32_0 = arith.constant 0 : i32
    %c0_i32_1 = arith.constant 0 : i32
    return %c0_i32, %c0_i32_0 : i32, i32
  }
  func.func @transform_3(%arg0: i32) -> (i32, i32) {
    %c0_i32 = arith.constant 0 : i32
    %c0_i32_0 = arith.constant 0 : i32
    %c0_i32_1 = arith.constant 0 : i32
    return %c0_i32, %c0_i32_0 : i32, i32
  }
  func.func @transform_4(%arg0: i32) -> (i32, i32) {
    %c0_i32 = arith.constant 0 : i32
    %c0_i32_0 = arith.constant 0 : i32
    %c0_i32_1 = arith.constant 0 : i32
    return %c0_i32, %c0_i32_0 : i32, i32
  }
  func.func @transform_5(%arg0: i32) -> (i32, i32, i32) {
    %c0_i32 = arith.constant 0 : i32
    %c0_i32_0 = arith.constant 0 : i32
    %c0_i32_1 = arith.constant 0 : i32
    return %arg0, %c0_i32, %c0_i32_0 : i32, i32, i32
  }
}

</mosaic_0001>

<llo_original>
// kernel: tpu_custom_call.1
$region0: #{tpu_custom_call.1}
  #allocation0 [shape = 'u32[]', space=smem, size = 0x4, offset = 0x4, fixed_abs, tag = 'smem constant byte address 0x4 - core index']
  #allocation1 [shape = 'u32[72,128]{1,0:T(1,128)}', space=vmem, size = 0x9000, scoped, tag = 'internal scratch']
  #allocation2 [shape = 'f32[64,128]{1,0:T(8,128)}', space=vmem, size = 0x8000, scoped, tag = 'scratch operand']
  #allocation3 [shape = 'f32[8,32]{1,0:T(8,128)}', space=vmem, size = 0x1000, scoped, tag = 'scratch operand']
  #allocation4 [shape = 'f32[8,32]{1,0:T(8,128)}', space=vmem, size = 0x1000, scoped, tag = 'scratch operand']
  %s0 = inlined_call_operand.vmem [shape: s32[8,1], index: 0, kind: input, shape index: {}]
  %s1 = inlined_call_operand.vmem [shape: f32[64,16], index: 1, kind: input, shape index: {}]
  %s2 = inlined_call_operand.vmem [shape: f32[16,128], index: 2, kind: input, shape index: {}]
  %s3 = inlined_call_operand.vmem [shape: f32[32,128], index: 3, kind: input, shape index: {}]
  %s4 = inlined_call_operand.vmem [shape: f32[1,128], index: 4, kind: input, shape index: {}]
  %s5 = inlined_call_operand.hbm [shape: f32[2,8,128], index: 5, kind: output, shape index: {}]
  %s6 = sld [smem:[#allocation0]]
  $region34: #{tpu_custom_call.1} parent=0
    _
  %s8 = ssub.s32 1, %s6
  %s9 = scalar_select 0, %s8, %s6
  $region1: #{tpu_custom_call.1} parent=0
    #allocation5 [shape = 'u8[8192]{0}', space=vmem, size = 0x2000, scoped, tag = 'output window, operand 0, single buffered']
    #allocation6 [shape = 's32[1]{0}', space=sflag, size = 0x4, scoped, tag = 'scoped memory for tpu_custom_call.1']
    %10 = vsyncpa [#allocation6], 0
    // Predicated region
    $region2: #{tpu_custom_call.1} parent=1 // pred_check
      _
    $region3: #{tpu_custom_call.1} parent=1 // pred_check_branch
      %12 = sbr.rel (0) target = $region5
    $region4: #{tpu_custom_call.1} parent=1 // pred_region
      _
    $region5: #{tpu_custom_call.1} parent=1 // pred_fallthru
      _
    // Predicated region
    $region6: #{tpu_custom_call.1} parent=1 // pred_check
      _
    $region7: #{tpu_custom_call.1} parent=1 // pred_check_branch
      %14 = sbr.rel (0) target = $region9
    $region8: #{tpu_custom_call.1} parent=1 // pred_region
      _
    $region9: #{tpu_custom_call.1} parent=1 // pred_fallthru
      _
    // Predicated region
    $region10: #{tpu_custom_call.1} parent=1 // pred_check
      _
    $region11: #{tpu_custom_call.1} parent=1 // pred_check_branch
      %16 = sbr.rel (0) target = $region13
    $region12: #{tpu_custom_call.1} parent=1 // pred_region
      _
    $region13: #{tpu_custom_call.1} parent=1 // pred_fallthru
      _
    // Predicated region
    $region14: #{tpu_custom_call.1} parent=1 // pred_check
      _
    $region15: #{tpu_custom_call.1} parent=1 // pred_check_branch
      %18 = sbr.rel (0) target = $region17
    $region16: #{tpu_custom_call.1} parent=1 // pred_region
      _
    $region17: #{tpu_custom_call.1} parent=1 // pred_fallthru
      _
    // Predicated region
    $region18: #{tpu_custom_call.1} parent=1 // pred_check
      _
    $region19: #{tpu_custom_call.1} parent=1 // pred_check_branch
      %20 = sbr.rel (0) target = $region21
    $region20: #{tpu_custom_call.1} parent=1 // pred_region
      _
    $region21: #{tpu_custom_call.1} parent=1 // pred_fallthru
      _
    %p21 = scmp.eq.s32.totalorder 0, 0
    // Predicated region
    $region22: #{tpu_custom_call.1} parent=1 // pred_check
      %p22 = pneg %p21
    $region23: #{tpu_custom_call.1} parent=1 // pred_check_branch
      %24 = sbr.rel (%p22) target = $region25
    $region24: #{tpu_custom_call.1} parent=1 // pred_region
      %vm25 = vcmask 261120
      %26 = vst.msk [vmem:[#allocation3] sm:$0xff] %vm25, 0.0
      %27 = vst.msk [vmem:[#allocation4] sm:$0xff] %vm25, 0.0
    $region25: #{tpu_custom_call.1} parent=1 // pred_fallthru
      _
    %v28 = vld [vmem:[%s1] sm:$0xff]
    %v29 = vld [vmem:[%s1 + $0x8] sm:$0xff]
    %v30 = vld [vmem:[%s1 + $0x10] sm:$0xff]
    %v31 = vld [vmem:[%s1 + $0x18] sm:$0xff]
    %v32 = vld [vmem:[%s1 + $0x20] sm:$0xff]
    %v33 = vld [vmem:[%s1 + $0x28] sm:$0xff]
    %v34 = vld [vmem:[%s1 + $0x30] sm:$0xff]
    %v35 = vld [vmem:[%s1 + $0x38] sm:$0xff]
    %v36 = vld [vmem:[%s2] sm:$0xff]
    %v37 = vld [vmem:[%s2 + $0x8] sm:$0xff]
    %v38 = vld [vmem:[%s4] sm:$0x1]
    %v40 = vperm.slane %v38, 0
    %vm42 = vcmask 130048
    %v44 = vsel %vm42, %v28, 0
    %v47 = vsel %vm42, %v29, 0
    %v50 = vsel %vm42, %v30, 0
    %v53 = vsel %vm42, %v31, 0
    %v56 = vsel %vm42, %v32, 0
    %v59 = vsel %vm42, %v33, 0
    %v62 = vsel %vm42, %v34, 0
    %v65 = vsel %vm42, %v35, 0
    %67 = vmatpush.msra.mxu0 0.0
    %68 = vmatpush.msra.mxu0 0.0
    %69 = vmatpush.msra.mxu0 0.0
    %70 = vmatpush.msra.mxu0 0.0
    %71 = vmatpush.msra.mxu0 0.0
    %72 = vmatpush.msra.mxu0 0.0
    %73 = vmatpush.msra.mxu0 0.0
    %74 = vmatpush.msra.mxu0 0.0
    %75 = vmatpush.msra.mxu0 0.0
    %76 = vmatpush.msra.mxu0 0.0
    %77 = vmatpush.msra.mxu0 0.0
    %78 = vmatpush.msra.mxu0 0.0
    %79 = vmatpush.msra.mxu0 0.0
    %80 = vmatpush.msra.mxu0 0.0
    %81 = vmatpush.msra.mxu0 %v37
    %82 = vmatpush.msra.mxu0 %v36
    %83 = vmatmul.f32.gmra.mxu0 %v44
    %v84 = vpop.f32.mrf.mxu0
    %v85 = vadd.f32 %v40, %v84
    %86 = vmatmul.f32.gmra.mxu0 %v47
    %v87 = vpop.f32.mrf.mxu0
    %v88 = vadd.f32 %v40, %v87
    %89 = vmatmul.f32.gmra.mxu0 %v50
    %v90 = vpop.f32.mrf.mxu0
    %v91 = vadd.f32 %v40, %v90
    %92 = vmatmul.f32.gmra.mxu0 %v53
    %v93 = vpop.f32.mrf.mxu0
    %v94 = vadd.f32 %v40, %v93
    %95 = vmatmul.f32.gmra.mxu0 %v56
    %v96 = vpop.f32.mrf.mxu0
    %v97 = vadd.f32 %v40, %v96
    %98 = vmatmul.f32.gmra.mxu0 %v59
    %v99 = vpop.f32.mrf.mxu0
    %v100 = vadd.f32 %v40, %v99
    %101 = vmatmul.f32.gmra.mxu0 %v62
    %v102 = vpop.f32.mrf.mxu0
    %v103 = vadd.f32 %v40, %v102
    %104 = vmatmul.f32.gmra.mxu0 %v65
    %v105 = vpop.f32.mrf.mxu0
    %v106 = vadd.f32 %v40, %v105
    %107 = vdwg.mxu0
    %108 = vst [vmem:[#allocation2] sm:$0xff] %v85
    %109 = vst [vmem:[#allocation2 + $0x8] sm:$0xff] %v88
    %110 = vst [vmem:[#allocation2 + $0x10] sm:$0xff] %v91
    %111 = vst [vmem:[#allocation2 + $0x18] sm:$0xff] %v94
    %112 = vst [vmem:[#allocation2 + $0x20] sm:$0xff] %v97
    %113 = vst [vmem:[#allocation2 + $0x28] sm:$0xff] %v100
    %114 = vst [vmem:[#allocation2 + $0x30] sm:$0xff] %v103
    %115 = vst [vmem:[#allocation2 + $0x38] sm:$0xff] %v106
    %v116 = vld [vmem:[%s3] sm:$0xff]
    %v117 = vld [vmem:[%s3 + $0x8] sm:$0xff]
    %v118 = vld [vmem:[%s3 + $0x10] sm:$0xff]
    %v119 = vld [vmem:[%s3 + $0x18] sm:$0xff]
    %v120 = vld [vmem:[%s0] sm:$0xff]
    %v121 = vlaneseq
    %v122 = vand.u32 %v121, 127
    %vm123 = vcmp.ge.s32.totalorder %v122, 64
    %vm124 = vcmp.lt.s32.totalorder %v122, 96
    %vm125 = vmand %vm123, %vm124
    %v126 = vsel %vm125, 1.0, 0.5
    %v127 = vsel %vm125, 0.0, 0.5
    %s128 = smul.u32 0, 8
    %v129 = vld [vmem:[#allocation3] sm:$0xff]
    %v130 = vld [vmem:[#allocation4] sm:$0xff]
    %v131 = vld [vmem:[#allocation2] sm:$0xff]
    %vm132 = vcmask 261120
    %v134 = vsel %vm132, %v129, 0
    %136 = vmatpush.msra.mxu0 0.0
    %137 = vmatpush.msra.mxu0 0.0
    %138 = vmatpush.msra.mxu0 0.0
    %139 = vmatpush.msra.mxu0 0.0
    %140 = vmatpush.msra.mxu0 0.0
    %141 = vmatpush.msra.mxu0 0.0
    %142 = vmatpush.msra.mxu0 0.0
    %143 = vmatpush.msra.mxu0 0.0
    %144 = vmatpush.msra.mxu0 0.0
    %145 = vmatpush.msra.mxu0 0.0
    %146 = vmatpush.msra.mxu0 0.0
    %147 = vmatpush.msra.mxu0 0.0
    %148 = vmatpush.msra.mxu0 %v119
    %149 = vmatpush.msra.mxu0 %v118
    %150 = vmatpush.msra.mxu0 %v117
    %151 = vmatpush.msra.mxu0 %v116
    %152 = vmatmul.f32.gmra.mxu0 %v134
    %v153 = vpop.f32.mrf.mxu0
    %v154 = vadd.f32 0.0, %v153
    %155 = vdwg.mxu0
    %v156 = vadd.f32 %v131, %v154
    %v157 = vtanh.pop %v156
    %v158 = vmul.f32 %v157, %v126
    %v159 = vadd.f32 %v158, %v127
    %161 = vrot.lane.b32.xlu0 %v130, 32
    %v162 = vpop.permute.xlu0 %161
    %v164 = vmul.f32 %v159, %v162
    %166 = vrot.lane.b32.xlu0 %v159, 64
    %v167 = vpop.permute.xlu0 %166
    %v169 = vmul.f32 %v159, %v167
    %171 = vrot.lane.b32.xlu0 %v169, 32
    %v172 = vpop.permute.xlu0 %171
    %v174 = vadd.f32 %v164, %v172
    %v175 = vtanh.pop %v174
    %177 = vrot.lane.b32.xlu0 %v175, 64
    %v178 = vpop.permute.xlu0 %177
    %v180 = vmul.f32 %v159, %v178
    %v181 = vstv %s128
    %vm182 = vcmp.lt.s32.totalorder %v181, %v120
    %v183 = vsel %vm182, 1, 0
    %184 = vset.pattern.permute.xlu0 0
    %185 = vperm.xlu0 %184, %v183
    %v186 = vpop.permute.xlu0 %185
    %vm187 = vcmp.eq.s32.totalorder %v186, 1
    %v188 = vsel %vm187, %v180, 0.0
    %s189 = scalar_lea.vmem [#allocation2], 8
    %v190 = vld [vmem:[%s189] sm:$0xff]
    %192 = vrot.lane.b32.xlu0 %v180, 32
    %v193 = vpop.permute.xlu0 %192
    %v194 = vsel %vm132, %v193, 0
    %196 = vmatpush.msra.mxu0 0.0
    %197 = vmatpush.msra.mxu0 0.0
    %198 = vmatpush.msra.mxu0 0.0
    %199 = vmatpush.msra.mxu0 0.0
    %200 = vmatpush.msra.mxu0 0.0
    %201 = vmatpush.msra.mxu0 0.0
    %202 = vmatpush.msra.mxu0 0.0
    %203 = vmatpush.msra.mxu0 0.0
    %204 = vmatpush.msra.mxu0 0.0
    %205 = vmatpush.msra.mxu0 0.0
    %206 = vmatpush.msra.mxu0 0.0
    %207 = vmatpush.msra.mxu0 0.0
    %208 = vmatpush.msra.mxu0 %v119
    %209 = vmatpush.msra.mxu0 %v118
    %210 = vmatpush.msra.mxu0 %v117
    %211 = vmatpush.msra.mxu0 %v116
    %212 = vmatmul.f32.gmra.mxu0 %v194
    %v213 = vpop.f32.mrf.mxu0
    %v214 = vadd.f32 0.0, %v213
    %215 = vdwg.mxu0
    %v216 = vadd.f32 %v190, %v214
    %v217 = vtanh.pop %v216
    %v218 = vmul.f32 %v217, %v126
    %v219 = vadd.f32 %v218, %v127
    %v220 = vmul.f32 %v219, %v174
    %222 = vrot.lane.b32.xlu0 %v219, 64
    %v223 = vpop.permute.xlu0 %222
    %v225 = vmul.f32 %v219, %v223
    %227 = vrot.lane.b32.xlu0 %v225, 32
    %v228 = vpop.permute.xlu0 %227
    %v230 = vadd.f32 %v220, %v228
    %v231 = vtanh.pop %v230
    %233 = vrot.lane.b32.xlu0 %v231, 64
    %v234 = vpop.permute.xlu0 %233
    %v236 = vmul.f32 %v219, %v234
    %s237 = sadd.s32 %s128, 1
    %v238 = vstv %s237
    %vm239 = vcmp.lt.s32.totalorder %v238, %v120
    %v240 = vsel %vm239, 1, 0
    %241 = vset.pattern.permute.xlu0 0
    %242 = vperm.xlu0 %241, %v240
    %v243 = vpop.permute.xlu0 %242
    %vm244 = vcmp.eq.s32.totalorder %v243, 1
    %v245 = vsel %vm244, %v236, 0.0
    %s246 = scalar_lea.vmem [#allocation2], 16
    %v247 = vld [vmem:[%s246] sm:$0xff]
    %249 = vrot.lane.b32.xlu0 %v236, 32
    %v250 = vpop.permute.xlu0 %249
    %v251 = vsel %vm132, %v250, 0
    %253 = vmatpush.msra.mxu0 0.0
    %254 = vmatpush.msra.mxu0 0.0
    %255 = vmatpush.msra.mxu0 0.0
    %256 = vmatpush.msra.mxu0 0.0
    %257 = vmatpush.msra.mxu0 0.0
    %258 = vmatpush.msra.mxu0 0.0
    %259 = vmatpush.msra.mxu0 0.0
    %260 = vmatpush.msra.mxu0 0.0
    %261 = vmatpush.msra.mxu0 0.0
    %262 = vmatpush.msra.mxu0 0.0
    %263 = vmatpush.msra.mxu0 0.0
    %264 = vmatpush.msra.mxu0 0.0
    %265 = vmatpush.msra.mxu0 %v119
    %266 = vmatpush.msra.mxu0 %v118
    %267 = vmatpush.msra.mxu0 %v117
    %268 = vmatpush.msra.mxu0 %v116
    %269 = vmatmul.f32.gmra.mxu0 %v251
    %v270 = vpop.f32.mrf.mxu0
    %v271 = vadd.f32 0.0, %v270
    %272 = vdwg.mxu0
    %v273 = vadd.f32 %v247, %v271
    %v274 = vtanh.pop %v273
    %v275 = vmul.f32 %v274, %v126
    %v276 = vadd.f32 %v275, %v127
    %v277 = vmul.f32 %v276, %v230
    %279 = vrot.lane.b32.xlu0 %v276, 64
    %v280 = vpop.permute.xlu0 %279
    %v282 = vmul.f32 %v276, %v280
    %284 = vrot.lane.b32.xlu0 %v282, 32
    %v285 = vpop.permute.xlu0 %284
    %v287 = vadd.f32 %v277, %v285
    %v288 = vtanh.pop %v287
    %290 = vrot.lane.b32.xlu0 %v288, 64
    %v291 = vpop.permute.xlu0 %290
    %v293 = vmul.f32 %v276, %v291
    %s294 = sadd.s32 %s128, 2
    %v295 = vstv %s294
    %vm296 = vcmp.lt.s32.totalorder %v295, %v120
    %v297 = vsel %vm296, 1, 0
    %298 = vset.pattern.permute.xlu0 0
    %299 = vperm.xlu0 %298, %v297
    %v300 = vpop.permute.xlu0 %299
    %vm301 = vcmp.eq.s32.totalorder %v300, 1
    %v302 = vsel %vm301, %v293, 0.0
    %s303 = scalar_lea.vmem [#allocation2], 24
    %v304 = vld [vmem:[%s303] sm:$0xff]
    %306 = vrot.lane.b32.xlu0 %v293, 32
    %v307 = vpop.permute.xlu0 %306
    %v308 = vsel %vm132, %v307, 0
    %310 = vmatpush.msra.mxu0 0.0
    %311 = vmatpush.msra.mxu0 0.0
    %312 = vmatpush.msra.mxu0 0.0
    %313 = vmatpush.msra.mxu0 0.0
    %314 = vmatpush.msra.mxu0 0.0
    %315 = vmatpush.msra.mxu0 0.0
    %316 = vmatpush.msra.mxu0 0.0
    %317 = vmatpush.msra.mxu0 0.0
    %318 = vmatpush.msra.mxu0 0.0
    %319 = vmatpush.msra.mxu0 0.0
    %320 = vmatpush.msra.mxu0 0.0
    %321 = vmatpush.msra.mxu0 0.0
    %322 = vmatpush.msra.mxu0 %v119
    %323 = vmatpush.msra.mxu0 %v118
    %324 = vmatpush.msra.mxu0 %v117
    %325 = vmatpush.msra.mxu0 %v116
    %326 = vmatmul.f32.gmra.mxu0 %v308
    %v327 = vpop.f32.mrf.mxu0
    %v328 = vadd.f32 0.0, %v327
    %329 = vdwg.mxu0
    %v330 = vadd.f32 %v304, %v328
    %v331 = vtanh.pop %v330
    %v332 = vmul.f32 %v331, %v126
    %v333 = vadd.f32 %v332, %v127
    %v334 = vmul.f32 %v333, %v287
    %336 = vrot.lane.b32.xlu0 %v333, 64
    %v337 = vpop.permute.xlu0 %336
    %v339 = vmul.f32 %v333, %v337
    %341 = vrot.lane.b32.xlu0 %v339, 32
    %v342 = vpop.permute.xlu0 %341
    %v344 = vadd.f32 %v334, %v342
    %v345 = vtanh.pop %v344
    %347 = vrot.lane.b32.xlu0 %v345, 64
    %v348 = vpop.permute.xlu0 %347
    %v350 = vmul.f32 %v333, %v348
    %s351 = sadd.s32 %s128, 3
    %v352 = vstv %s351
    %vm353 = vcmp.lt.s32.totalorder %v352, %v120
    %v354 = vsel %vm353, 1, 0
    %355 = vset.pattern.permute.xlu0 0
    %356 = vperm.xlu0 %355, %v354
    %v357 = vpop.permute.xlu0 %356
    %vm358 = vcmp.eq.s32.totalorder %v357, 1
    %v359 = vsel %vm358, %v350, 0.0
    %361 = vrot.lane.b32.xlu0 %v188, 32
    %v362 = vpop.permute.xlu0 %361
    %365 = vrot.lane.b32.xlu0 %v245, 64
    %v366 = vpop.permute.xlu0 %365
    %369 = vrot.lane.b32.xlu0 %v302, 96
    %v370 = vpop.permute.xlu0 %369
    %v372 = vsel %vm132, %v362, %v366
    %vm373 = vcmask 523264
    %v374 = vsel %vm373, %v372, %v370
    %vm375 = vcmask 785408
    %v376 = vsel %vm375, %v374, %v359
    %377 = vst [vmem:[#allocation5] sm:$0xff] %v376
    %s378 = scalar_lea.vmem [#allocation2], 32
    %v379 = vld [vmem:[%s378] sm:$0xff]
    %381 = vrot.lane.b32.xlu0 %v350, 32
    %v382 = vpop.permute.xlu0 %381
    %v383 = vsel %vm132, %v382, 0
    %385 = vmatpush.msra.mxu0 0.0
    %386 = vmatpush.msra.mxu0 0.0
    %387 = vmatpush.msra.mxu0 0.0
    %388 = vmatpush.msra.mxu0 0.0
    %389 = vmatpush.msra.mxu0 0.0
    %390 = vmatpush.msra.mxu0 0.0
    %391 = vmatpush.msra.mxu0 0.0
    %392 = vmatpush.msra.mxu0 0.0
    %393 = vmatpush.msra.mxu0 0.0
    %394 = vmatpush.msra.mxu0 0.0
    %395 = vmatpush.msra.mxu0 0.0
    %396 = vmatpush.msra.mxu0 0.0
    %397 = vmatpush.msra.mxu0 %v119
    %398 = vmatpush.msra.mxu0 %v118
    %399 = vmatpush.msra.mxu0 %v117
    %400 = vmatpush.msra.mxu0 %v116
    %401 = vmatmul.f32.gmra.mxu0 %v383
    %v402 = vpop.f32.mrf.mxu0
    %v403 = vadd.f32 0.0, %v402
    %404 = vdwg.mxu0
    %v405 = vadd.f32 %v379, %v403
    %v406 = vtanh.pop %v405
    %v407 = vmul.f32 %v406, %v126
    %v408 = vadd.f32 %v407, %v127
    %v409 = vmul.f32 %v408, %v344
    %411 = vrot.lane.b32.xlu0 %v408, 64
    %v412 = vpop.permute.xlu0 %411
    %v414 = vmul.f32 %v408, %v412
    %416 = vrot.lane.b32.xlu0 %v414, 32
    %v417 = vpop.permute.xlu0 %416
    %v419 = vadd.f32 %v409, %v417
    %v420 = vtanh.pop %v419
    %422 = vrot.lane.b32.xlu0 %v420, 64
    %v423 = vpop.permute.xlu0 %422
    %v425 = vmul.f32 %v408, %v423
    %s426 = sadd.s32 %s128, 4
    %v427 = vstv %s426
    %vm428 = vcmp.lt.s32.totalorder %v427, %v120
    %v429 = vsel %vm428, 1, 0
    %430 = vset.pattern.permute.xlu0 0
    %431 = vperm.xlu0 %430, %v429
    %v432 = vpop.permute.xlu0 %431
    %vm433 = vcmp.eq.s32.totalorder %v432, 1
    %v434 = vsel %vm433, %v425, 0.0
    %s435 = scalar_lea.vmem [#allocation2], 40
    %v436 = vld [vmem:[%s435] sm:$0xff]
    %438 = vrot.lane.b32.xlu0 %v425, 32
    %v439 = vpop.permute.xlu0 %438
    %v440 = vsel %vm132, %v439, 0
    %442 = vmatpush.msra.mxu0 0.0
    %443 = vmatpush.msra.mxu0 0.0
    %444 = vmatpush.msra.mxu0 0.0
    %445 = vmatpush.msra.mxu0 0.0
    %446 = vmatpush.msra.mxu0 0.0
    %447 = vmatpush.msra.mxu0 0.0
    %448 = vmatpush.msra.mxu0 0.0
    %449 = vmatpush.msra.mxu0 0.0
    %450 = vmatpush.msra.mxu0 0.0
    %451 = vmatpush.msra.mxu0 0.0
    %452 = vmatpush.msra.mxu0 0.0
    %453 = vmatpush.msra.mxu0 0.0
    %454 = vmatpush.msra.mxu0 %v119
    %455 = vmatpush.msra.mxu0 %v118
    %456 = vmatpush.msra.mxu0 %v117
    %457 = vmatpush.msra.mxu0 %v116
    %458 = vmatmul.f32.gmra.mxu0 %v440
    %v459 = vpop.f32.mrf.mxu0
    %v460 = vadd.f32 0.0, %v459
    %461 = vdwg.mxu0
    %v462 = vadd.f32 %v436, %v460
    %v463 = vtanh.pop %v462
    %v464 = vmul.f32 %v463, %v126
    %v465 = vadd.f32 %v464, %v127
    %v466 = vmul.f32 %v465, %v419
    %468 = vrot.lane.b32.xlu0 %v465, 64
    %v469 = vpop.permute.xlu0 %468
    %v471 = vmul.f32 %v465, %v469
    %473 = vrot.lane.b32.xlu0 %v471, 32
    %v474 = vpop.permute.xlu0 %473
    %v476 = vadd.f32 %v466, %v474
    %v477 = vtanh.pop %v476
    %479 = vrot.lane.b32.xlu0 %v477, 64
    %v480 = vpop.permute.xlu0 %479
    %v482 = vmul.f32 %v465, %v480
    %s483 = sadd.s32 %s128, 5
    %v484 = vstv %s483
    %vm485 = vcmp.lt.s32.totalorder %v484, %v120
    %v486 = vsel %vm485, 1, 0
    %487 = vset.pattern.permute.xlu0 0
    %488 = vperm.xlu0 %487, %v486
    %v489 = vpop.permute.xlu0 %488
    %vm490 = vcmp.eq.s32.totalorder %v489, 1
    %v491 = vsel %vm490, %v482, 0.0
    %s492 = scalar_lea.vmem [#allocation2], 48
    %v493 = vld [vmem:[%s492] sm:$0xff]
    %495 = vrot.lane.b32.xlu0 %v482, 32
    %v496 = vpop.permute.xlu0 %495
    %v497 = vsel %vm132, %v496, 0
    %499 = vmatpush.msra.mxu0 0.0
    %500 = vmatpush.msra.mxu0 0.0
    %501 = vmatpush.msra.mxu0 0.0
    %502 = vmatpush.msra.mxu0 0.0
    %503 = vmatpush.msra.mxu0 0.0
    %504 = vmatpush.msra.mxu0 0.0
    %505 = vmatpush.msra.mxu0 0.0
    %506 = vmatpush.msra.mxu0 0.0
    %507 = vmatpush.msra.mxu0 0.0
    %508 = vmatpush.msra.mxu0 0.0
    %509 = vmatpush.msra.mxu0 0.0
    %510 = vmatpush.msra.mxu0 0.0
    %511 = vmatpush.msra.mxu0 %v119
    %512 = vmatpush.msra.mxu0 %v118
    %513 = vmatpush.msra.mxu0 %v117
    %514 = vmatpush.msra.mxu0 %v116
    %515 = vmatmul.f32.gmra.mxu0 %v497
    %v516 = vpop.f32.mrf.mxu0
    %v517 = vadd.f32 0.0, %v516
    %518 = vdwg.mxu0
    %v519 = vadd.f32 %v493, %v517
    %v520 = vtanh.pop %v519
    %v521 = vmul.f32 %v520, %v126
    %v522 = vadd.f32 %v521, %v127
    %v523 = vmul.f32 %v522, %v476
    %525 = vrot.lane.b32.xlu0 %v522, 64
    %v526 = vpop.permute.xlu0 %525
    %v528 = vmul.f32 %v522, %v526
    %530 = vrot.lane.b32.xlu0 %v528, 32
    %v531 = vpop.permute.xlu0 %530
    %v533 = vadd.f32 %v523, %v531
    %v534 = vtanh.pop %v533
    %536 = vrot.lane.b32.xlu0 %v534, 64
    %v537 = vpop.permute.xlu0 %536
    %v539 = vmul.f32 %v522, %v537
    %s540 = sadd.s32 %s128, 6
    %v541 = vstv %s540
    %vm542 = vcmp.lt.s32.totalorder %v541, %v120
    %v543 = vsel %vm542, 1, 0
    %544 = vset.pattern.permute.xlu0 0
    %545 = vperm.xlu0 %544, %v543
    %v546 = vpop.permute.xlu0 %545
    %vm547 = vcmp.eq.s32.totalorder %v546, 1
    %v548 = vsel %vm547, %v539, 0.0
    %s549 = scalar_lea.vmem [#allocation2], 56
    %v550 = vld [vmem:[%s549] sm:$0xff]
    %552 = vrot.lane.b32.xlu0 %v539, 32
    %v553 = vpop.permute.xlu0 %552
    %v554 = vsel %vm132, %v553, 0
    %556 = vmatpush.msra.mxu0 0.0
    %557 = vmatpush.msra.mxu0 0.0
    %558 = vmatpush.msra.mxu0 0.0
    %559 = vmatpush.msra.mxu0 0.0
    %560 = vmatpush.msra.mxu0 0.0
    %561 = vmatpush.msra.mxu0 0.0
    %562 = vmatpush.msra.mxu0 0.0
    %563 = vmatpush.msra.mxu0 0.0
    %564 = vmatpush.msra.mxu0 0.0
    %565 = vmatpush.msra.mxu0 0.0
    %566 = vmatpush.msra.mxu0 0.0
    %567 = vmatpush.msra.mxu0 0.0
    %568 = vmatpush.msra.mxu0 %v119
    %569 = vmatpush.msra.mxu0 %v118
    %570 = vmatpush.msra.mxu0 %v117
    %571 = vmatpush.msra.mxu0 %v116
    %572 = vmatmul.f32.gmra.mxu0 %v554
    %v573 = vpop.f32.mrf.mxu0
    %v574 = vadd.f32 0.0, %v573
    %575 = vdwg.mxu0
    %v576 = vadd.f32 %v550, %v574
    %v577 = vtanh.pop %v576
    %v578 = vmul.f32 %v577, %v126
    %v579 = vadd.f32 %v578, %v127
    %v580 = vmul.f32 %v579, %v533
    %582 = vrot.lane.b32.xlu0 %v579, 64
    %v583 = vpop.permute.xlu0 %582
    %v585 = vmul.f32 %v579, %v583
    %587 = vrot.lane.b32.xlu0 %v585, 32
    %v588 = vpop.permute.xlu0 %587
    %v590 = vadd.f32 %v580, %v588
    %v591 = vtanh.pop %v590
    %593 = vrot.lane.b32.xlu0 %v591, 64
    %v594 = vpop.permute.xlu0 %593
    %v596 = vmul.f32 %v579, %v594
    %s597 = sadd.s32 %s128, 7
    %v598 = vstv %s597
    %vm599 = vcmp.lt.s32.totalorder %v598, %v120
    %v600 = vsel %vm599, 1, 0
    %601 = vset.pattern.permute.xlu0 0
    %602 = vperm.xlu0 %601, %v600
    %v603 = vpop.permute.xlu0 %602
    %vm604 = vcmp.eq.s32.totalorder %v603, 1
    %v605 = vsel %vm604, %v596, 0.0
    %607 = vrot.lane.b32.xlu0 %v434, 32
    %v608 = vpop.permute.xlu0 %607
    %611 = vrot.lane.b32.xlu0 %v491, 64
    %v612 = vpop.permute.xlu0 %611
    %615 = vrot.lane.b32.xlu0 %v548, 96
    %v616 = vpop.permute.xlu0 %615
    %v618 = vsel %vm132, %v608, %v612
    %v619 = vsel %vm373, %v618, %v616
    %v620 = vsel %vm375, %v619, %v605
    %s621 = scalar_lea.vmem [#allocation5], 8
    %622 = vst [vmem:[%s621] sm:$0xff] %v620
    %624 = vrot.lane.b32.xlu0 %v596, 32
    %v625 = vpop.permute.xlu0 %624
    %627 = vst.msk [vmem:[#allocation3] sm:$0xff] %vm132, %v625
    %629 = vrot.lane.b32.xlu0 %v590, 96
    %v630 = vpop.permute.xlu0 %629
    %632 = vst.msk [vmem:[#allocation4] sm:$0xff] %vm132, %v630
    // Predicated region
    $region26: #{tpu_custom_call.1} parent=1 // pred_check
      _
    $region27: #{tpu_custom_call.1} parent=1 // pred_check_branch
      %634 = sbr.rel (0) target = $region29
    $region28: #{tpu_custom_call.1} parent=1 // pred_region
      %636 = vsyncadd [#allocation6], 0
      %s637 = sshll.u32 [#allocation5], 4
      %s638 = int_to_ptr.vmem [resolvable:$true] %s637
      %s639 = sshll.u32 %s5, 4
      %s640 = int_to_ptr.hbm [resolvable:$true] %s639
      %645 = dma.vmem_to_hbm [thread:$0]  %s638, 256, %s640, [#allocation6], 128, 128, 8
    $region29: #{tpu_custom_call.1} parent=1 // pred_fallthru
      _
    // Predicated region
    $region30: #{tpu_custom_call.1} parent=1 // pred_check
      _
    $region31: #{tpu_custom_call.1} parent=1 // pred_check_branch
      %647 = sbr.rel (0) target = $region33
    $region32: #{tpu_custom_call.1} parent=1 // pred_region
      %649 = dma.done [#allocation6], 256
    $region33: #{tpu_custom_call.1} parent=1 // pred_fallthru
      _
    %650 = vsyncpa [#allocation6], 1

</llo_original>
